<compile_context>
chip_gen: v5e
topology: v5e:2x2
jax: 0.10.0
libtpu: 0.0.40
codegen_flags: <defaults>
</compile_context>

<pallas_src>
import functools

import jax
import jax.numpy as jnp
from jax.experimental import pallas as pl
from jax.experimental.pallas import tpu as pltpu

_LANE = 128
_SUBLANE = 8
_TARGET_TB = 512  # batch-tile rows; amortizes ~0.35us per-grid-step overhead


def _round_up(x, m):
    return (x + m - 1) // m * m


def _make_kernel(num_inputs):
    """Kernel factory closing over the (static) number of concatenated inputs."""

    def kernel(*refs):
        x_refs = refs[:num_inputs]
        w1_refs = refs[num_inputs:2 * num_inputs]
        b1_ref, wh_ref, bh_ref, whd_ref, bhd_ref, out_ref = refs[2 * num_inputs:]

        # layer 1: in-kernel concat == K-split partial matmuls, f32 accumulation
        acc = None
        for x_ref, w_ref in zip(x_refs, w1_refs):
            part = jnp.dot(x_ref[...].astype(jnp.bfloat16), w_ref[...],
                           preferred_element_type=jnp.float32)
            acc = part if acc is None else acc + part
        h = jnp.maximum(acc + b1_ref[...], 0.0).astype(jnp.bfloat16)

        # hidden layer (num_hidden_layers = 1)
        h = jnp.dot(h, wh_ref[...], preferred_element_type=jnp.float32)
        h = jnp.maximum(h + bh_ref[...], 0.0).astype(jnp.bfloat16)

        # fused mean|log_std head -> one lane-dense (TB, 128) output store
        y = jnp.dot(h, whd_ref[...], preferred_element_type=jnp.float32)
        out_ref[...] = (y + bhd_ref[...]).astype(out_ref.dtype)

    return kernel


def init_params(key, input_dim, output_dim, hidden_dim):
    """Mirror weights_init_: orthogonal weights (gain=1), zero biases.

    Weights are stored transposed vs PyTorch: (in_features, out_features)."""
    ortho = jax.nn.initializers.orthogonal(scale=1.0)
    k1, k2, k3, k4 = jax.random.split(key, 4)
    return {
        "w1": ortho(k1, (input_dim, hidden_dim), jnp.float32),
        "b1": jnp.zeros((1, hidden_dim), jnp.float32),
        "wh": ortho(k2, (hidden_dim, hidden_dim), jnp.float32),
        "bh": jnp.zeros((1, hidden_dim), jnp.float32),
        "wm": ortho(k3, (hidden_dim, output_dim), jnp.float32),
        "bm": jnp.zeros((1, output_dim), jnp.float32),
        "ws": ortho(k4, (hidden_dim, output_dim), jnp.float32),
        "bs": jnp.zeros((1, output_dim), jnp.float32),
    }


def pack_params(params, input_dims):
    """One-time layout prep: pad hidden to 128 lanes, split w1 per input,
    fuse the two heads, cast matmul operands to bf16. All padding is zeros,
    which keeps results exact (ReLU(0)=0, zero rows contribute 0)."""
    hidden = params["w1"].shape[1]
    out_dim = params["wm"].shape[1]
    h_pad = _round_up(hidden, _LANE)
    o2 = _round_up(2 * out_dim, _LANE)

    w1_parts, off = [], 0
    for d in input_dims:
        part = params["w1"][off:off + d, :]
        part = jnp.pad(part, ((0, 0), (0, h_pad - hidden)))
        w1_parts.append(part.astype(jnp.bfloat16))
        off += d

    def _bias(b, width):
        b = jnp.reshape(b, (1, -1)).astype(jnp.float32)
        return jnp.pad(b, ((0, 0), (0, width - b.shape[1])))

    wh = jnp.pad(params["wh"], ((0, h_pad - hidden), (0, h_pad - hidden)))
    w_head = jnp.concatenate([params["wm"], params["ws"]], axis=1)
    w_head = jnp.pad(w_head, ((0, h_pad - hidden), (0, o2 - 2 * out_dim)))
    b_head = jnp.concatenate(
        [jnp.reshape(params["bm"], (1, -1)), jnp.reshape(params["bs"], (1, -1))],
        axis=1)

    return {
        "w1_parts": tuple(w1_parts),
        "b1": _bias(params["b1"], h_pad),
        "wh": wh.astype(jnp.bfloat16),
        "bh": _bias(params["bh"], h_pad),
        "w_head": w_head.astype(jnp.bfloat16),
        "b_head": _bias(b_head, o2),
    }


@functools.partial(jax.jit, static_argnames=("out_dim",))
def gaussian_network_forward(packed, *inputs, out_dim):
    """Forward pass: returns (mean, log_std), matching GaussianNetwork.forward."""
    num_inputs = len(inputs)
    in_dims = tuple(int(x.shape[1]) for x in inputs)
    batch = int(inputs[0].shape[0])

    h_pad = packed["wh"].shape[0]
    o2 = packed["w_head"].shape[1]

    tb = min(_TARGET_TB, _round_up(batch, _SUBLANE))
    b_pad = _round_up(batch, tb)
    grid = (b_pad // tb,)

    xs = [jnp.pad(x, ((0, b_pad - batch), (0, 0))) if b_pad != batch else x
          for x in inputs]

    x_specs = [pl.BlockSpec((tb, d), lambda i: (i, 0)) for d in in_dims]

    def resident(a):  # whole array, VMEM-resident across grid steps
        return pl.BlockSpec(a.shape, lambda i: (0, 0))

    w_specs = [resident(w) for w in packed["w1_parts"]]
    w_specs += [resident(packed[k])
                for k in ("b1", "wh", "bh", "w_head", "b_head")]
    out_spec = pl.BlockSpec((tb, o2), lambda i: (i, 0))

    # VMEM budget: resident weights + double-buffered activation/output tiles.
    weight_bytes = sum(int(w.size) * w.dtype.itemsize
                       for w in (*packed["w1_parts"], packed["b1"], packed["wh"],
                                 packed["bh"], packed["w_head"], packed["b_head"]))
    stream_bytes = 2 * (sum(tb * d * 4 for d in in_dims) + tb * o2 * 4)
    vmem_limit = int(min(2 * (weight_bytes + stream_bytes) + (8 << 20), 48 << 20))

    flops = 2 * b_pad * (sum(in_dims) * h_pad + h_pad * h_pad + h_pad * o2)
    bytes_accessed = (sum(b_pad * d * 4 for d in in_dims)
                      + b_pad * o2 * 4 + weight_bytes)

    y = pl.pallas_call(
        _make_kernel(num_inputs),
        out_shape=jax.ShapeDtypeStruct((b_pad, o2), jnp.float32),
        grid=grid,
        in_specs=x_specs + w_specs,
        out_specs=out_spec,
        compiler_params=pltpu.CompilerParams(
            dimension_semantics=("parallel",),
            vmem_limit_bytes=vmem_limit),
        cost_estimate=pl.CostEstimate(
            flops=flops, transcendentals=0, bytes_accessed=bytes_accessed),
    )(*xs, *packed["w1_parts"], packed["b1"], packed["wh"], packed["bh"],
      packed["w_head"], packed["b_head"])

    mean = y[:batch, :out_dim]
    log_std = y[:batch, out_dim:2 * out_dim]
    return mean, log_std


def reference_forward(params, *inputs, bf16_matmul=True):
    """Pure-JAX reference on the ORIGINAL (unpadded, unfused) params."""
    x = jnp.concatenate(inputs, axis=-1)

    def mm(a, w):
        if bf16_matmul:
            a, w = a.astype(jnp.bfloat16), w.astype(jnp.bfloat16)
        return jnp.dot(a, w, preferred_element_type=jnp.float32)

    h = jnp.maximum(mm(x, params["w1"]) + params["b1"], 0.0)
    h = jnp.maximum(mm(h, params["wh"]) + params["bh"], 0.0)
    mean = mm(h, params["wm"]) + params["bm"]
    log_std = mm(h, params["ws"]) + params["bs"]
    return mean, log_std


if __name__ == "__main__":
    key = jax.random.PRNGKey(0)
    k_data, k_params = jax.random.split(key)

    in_dims = (16, 16)        # two inputs concatenated along the last dim
    hidden_dim = 32
    output_dim = 8

    params = init_params(k_params, sum(in_dims), output_dim, hidden_dim)
    packed = pack_params(params, in_dims)

    # Small case (single grid step) + larger case (batch padding, 2 grid steps).
    for batch in (8, 1000):
        kk = jax.random.fold_in(k_data, batch)
        k1, k2 = jax.random.split(kk)
        x1 = jax.random.normal(k1, (batch, in_dims[0]), jnp.float32)
        x2 = jax.random.normal(k2, (batch, in_dims[1]), jnp.float32)

        mean, log_std = gaussian_network_forward(packed, x1, x2,
                                                 out_dim=output_dim)
        mean = jax.block_until_ready(mean)
        log_std = jax.block_until_ready(log_std)

        assert mean.shape == (batch, output_dim)
        assert log_std.shape == (batch, output_dim)

        # Matched-precision reference (bf16 MXU operands, f32 accumulation).
        rm, rs = reference_forward(params, x1, x2, bf16_matmul=True)
        assert bool(jnp.allclose(mean, rm, atol=2e-3, rtol=2e-3))
        assert bool(jnp.allclose(log_std, rs, atol=2e-3, rtol=2e-3))

        # Coarse sanity vs full-f32 math (bounds bf16 quantization error).
        fm, fs = reference_forward(params, x1, x2, bf16_matmul=False)
        assert bool(jnp.allclose(mean, fm, atol=5e-2, rtol=5e-2))
        assert bool(jnp.allclose(log_std, fs, atol=5e-2, rtol=5e-2))

    # TODO(synk): sample()/log_prob()/get_dist() (Normal rsample / log_prob /
    # KLD) are distribution utilities layered on top of forward(); only the
    # forward() hot path is implemented as a Pallas kernel here.
    print("KERNEL_OK")
</pallas_src>

<mosaic_0001>
module attributes {stable_mosaic.version = 11 : i64} {
  func.func @kernel(%arg0: i32, %arg1: memref<8x16xf32, #tpu.memory_space<vmem>>, %arg2: memref<8x16xf32, #tpu.memory_space<vmem>>, %arg3: memref<16x128xbf16, #tpu.memory_space<vmem>>, %arg4: memref<16x128xbf16, #tpu.memory_space<vmem>>, %arg5: memref<1x128xf32, #tpu.memory_space<vmem>>, %arg6: memref<128x128xbf16, #tpu.memory_space<vmem>>, %arg7: memref<1x128xf32, #tpu.memory_space<vmem>>, %arg8: memref<128x128xbf16, #tpu.memory_space<vmem>>, %arg9: memref<1x128xf32, #tpu.memory_space<vmem>>, %arg10: memref<8x128xf32, #tpu.memory_space<vmem>>) attributes {dimension_semantics = [#tpu.dimension_semantics<parallel>], iteration_bounds = array<i64: 1>, scalar_prefetch = 0 : i64, scratch_operands = 0 : i64, tpu.core_type = #tpu.core_type<tc>, window_params = [{transform_indices = @transform_0, window_bounds = array<i64: 8, 16>}, {transform_indices = @transform_1, window_bounds = array<i64: 8, 16>}, {pipeline_mode = #tpu.pipeline_mode<synchronous>, transform_indices = @transform_2, window_bounds = array<i64: 16, 128>}, {pipeline_mode = #tpu.pipeline_mode<synchronous>, transform_indices = @transform_3, window_bounds = array<i64: 16, 128>}, {pipeline_mode = #tpu.pipeline_mode<synchronous>, transform_indices = @transform_4, window_bounds = array<i64: 1, 128>}, {pipeline_mode = #tpu.pipeline_mode<synchronous>, transform_indices = @transform_5, window_bounds = array<i64: 128, 128>}, {pipeline_mode = #tpu.pipeline_mode<synchronous>, transform_indices = @transform_6, window_bounds = array<i64: 1, 128>}, {pipeline_mode = #tpu.pipeline_mode<synchronous>, transform_indices = @transform_7, window_bounds = array<i64: 128, 128>}, {pipeline_mode = #tpu.pipeline_mode<synchronous>, transform_indices = @transform_8, window_bounds = array<i64: 1, 128>}, {transform_indices = @transform_9, window_bounds = array<i64: 8, 128>}]} {
    %c0 = arith.constant 0 : index
    %c0_0 = arith.constant 0 : index
    %0 = vector.load %arg1[%c0, %c0_0] : memref<8x16xf32, #tpu.memory_space<vmem>>, vector<8x16xf32>
    %1 = arith.truncf %0 : vector<8x16xf32> to vector<8x16xbf16>
    %c0_1 = arith.constant 0 : index
    %c0_2 = arith.constant 0 : index
    %2 = vector.load %arg3[%c0_1, %c0_2] : memref<16x128xbf16, #tpu.memory_space<vmem>>, vector<16x128xbf16>
    %cst = arith.constant dense<0.000000e+00> : vector<8x128xf32>
    %3 = tpu.matmul %1, %2, %cst {dimension_numbers = #tpu.dot_dimension_numbers<[1], [0], [0], [1], [0, 0, 1, 1], [], []>} : vector<8x16xbf16>, vector<16x128xbf16>, vector<8x128xf32> -> vector<8x128xf32>
    %c0_3 = arith.constant 0 : index
    %c0_4 = arith.constant 0 : index
    %4 = vector.load %arg2[%c0_3, %c0_4] : memref<8x16xf32, #tpu.memory_space<vmem>>, vector<8x16xf32>
    %5 = arith.truncf %4 : vector<8x16xf32> to vector<8x16xbf16>
    %c0_5 = arith.constant 0 : index
    %c0_6 = arith.constant 0 : index
    %6 = vector.load %arg4[%c0_5, %c0_6] : memref<16x128xbf16, #tpu.memory_space<vmem>>, vector<16x128xbf16>
    %cst_7 = arith.constant dense<0.000000e+00> : vector<8x128xf32>
    %7 = tpu.matmul %5, %6, %cst_7 {dimension_numbers = #tpu.dot_dimension_numbers<[1], [0], [0], [1], [0, 0, 1, 1], [], []>} : vector<8x16xbf16>, vector<16x128xbf16>, vector<8x128xf32> -> vector<8x128xf32>
    %8 = arith.addf %3, %7 : vector<8x128xf32>
    %c0_8 = arith.constant 0 : index
    %c0_9 = arith.constant 0 : index
    %9 = vector.load %arg5[%c0_8, %c0_9] : memref<1x128xf32, #tpu.memory_space<vmem>>, vector<1x128xf32>
    %10 = vector.broadcast %9 : vector<1x128xf32> to vector<8x128xf32>
    %11 = arith.addf %8, %10 : vector<8x128xf32>
    %cst_10 = arith.constant 0.000000e+00 : f32
    %12 = vector.broadcast %cst_10 : f32 to vector<8x128xf32>
    %13 = arith.maximumf %11, %12 : vector<8x128xf32>
    %14 = arith.truncf %13 : vector<8x128xf32> to vector<8x128xbf16>
    %c0_11 = arith.constant 0 : index
    %c0_12 = arith.constant 0 : index
    %15 = vector.load %arg6[%c0_11, %c0_12] : memref<128x128xbf16, #tpu.memory_space<vmem>>, vector<128x128xbf16>
    %cst_13 = arith.constant dense<0.000000e+00> : vector<8x128xf32>
    %16 = tpu.matmul %14, %15, %cst_13 {dimension_numbers = #tpu.dot_dimension_numbers<[1], [0], [0], [1], [0, 0, 1, 1], [], []>} : vector<8x128xbf16>, vector<128x128xbf16>, vector<8x128xf32> -> vector<8x128xf32>
    %c0_14 = arith.constant 0 : index
    %c0_15 = arith.constant 0 : index
    %17 = vector.load %arg7[%c0_14, %c0_15] : memref<1x128xf32, #tpu.memory_space<vmem>>, vector<1x128xf32>
    %18 = vector.broadcast %17 : vector<1x128xf32> to vector<8x128xf32>
    %19 = arith.addf %16, %18 : vector<8x128xf32>
    %cst_16 = arith.constant 0.000000e+00 : f32
    %20 = vector.broadcast %cst_16 : f32 to vector<8x128xf32>
    %21 = arith.maximumf %19, %20 : vector<8x128xf32>
    %22 = arith.truncf %21 : vector<8x128xf32> to vector<8x128xbf16>
    %c0_17 = arith.constant 0 : index
    %c0_18 = arith.constant 0 : index
    %23 = vector.load %arg8[%c0_17, %c0_18] : memref<128x128xbf16, #tpu.memory_space<vmem>>, vector<128x128xbf16>
    %cst_19 = arith.constant dense<0.000000e+00> : vector<8x128xf32>
    %24 = tpu.matmul %22, %23, %cst_19 {dimension_numbers = #tpu.dot_dimension_numbers<[1], [0], [0], [1], [0, 0, 1, 1], [], []>} : vector<8x128xbf16>, vector<128x128xbf16>, vector<8x128xf32> -> vector<8x128xf32>
    %c0_20 = arith.constant 0 : index
    %c0_21 = arith.constant 0 : index
    %25 = vector.load %arg9[%c0_20, %c0_21] : memref<1x128xf32, #tpu.memory_space<vmem>>, vector<1x128xf32>
    %26 = vector.broadcast %25 : vector<1x128xf32> to vector<8x128xf32>
    %27 = arith.addf %24, %26 : vector<8x128xf32>
    %c0_22 = arith.constant 0 : index
    %c0_23 = arith.constant 0 : index
    %28 = vector.load %arg10[%c0_22, %c0_23] : memref<8x128xf32, #tpu.memory_space<vmem>>, vector<8x128xf32>
    tpu.vector_store %arg10[%c0_22, %c0_23], %27 {strides = array<i32>} : memref<8x128xf32, #tpu.memory_space<vmem>>, vector<8x128xf32>,
    return
  }
  func.func @transform_0(%arg0: i32) -> (i32, i32) {
    %c0_i32 = arith.constant 0 : i32
    %c0_i32_0 = arith.constant 0 : i32
    return %arg0, %c0_i32 : i32, i32
  }
  func.func @transform_1(%arg0: i32) -> (i32, i32) {
    %c0_i32 = arith.constant 0 : i32
    %c0_i32_0 = arith.constant 0 : i32
    return %arg0, %c0_i32 : i32, i32
  }
  func.func @transform_2(%arg0: i32) -> (i32, i32) {
    %c0_i32 = arith.constant 0 : i32
    %c0_i32_0 = arith.constant 0 : i32
    %c0_i32_1 = arith.constant 0 : i32
    return %c0_i32, %c0_i32_0 : i32, i32
  }
  func.func @transform_3(%arg0: i32) -> (i32, i32) {
    %c0_i32 = arith.constant 0 : i32
    %c0_i32_0 = arith.constant 0 : i32
    %c0_i32_1 = arith.constant 0 : i32
    return %c0_i32, %c0_i32_0 : i32, i32
  }
  func.func @transform_4(%arg0: i32) -> (i32, i32) {
    %c0_i32 = arith.constant 0 : i32
    %c0_i32_0 = arith.constant 0 : i32
    %c0_i32_1 = arith.constant 0 : i32
    return %c0_i32, %c0_i32_0 : i32, i32
  }
  func.func @transform_5(%arg0: i32) -> (i32, i32) {
    %c0_i32 = arith.constant 0 : i32
    %c0_i32_0 = arith.constant 0 : i32
    %c0_i32_1 = arith.constant 0 : i32
    return %c0_i32, %c0_i32_0 : i32, i32
  }
  func.func @transform_6(%arg0: i32) -> (i32, i32) {
    %c0_i32 = arith.constant 0 : i32
    %c0_i32_0 = arith.constant 0 : i32
    %c0_i32_1 = arith.constant 0 : i32
    return %c0_i32, %c0_i32_0 : i32, i32
  }
  func.func @transform_7(%arg0: i32) -> (i32, i32) {
    %c0_i32 = arith.constant 0 : i32
    %c0_i32_0 = arith.constant 0 : i32
    %c0_i32_1 = arith.constant 0 : i32
    return %c0_i32, %c0_i32_0 : i32, i32
  }
  func.func @transform_8(%arg0: i32) -> (i32, i32) {
    %c0_i32 = arith.constant 0 : i32
    %c0_i32_0 = arith.constant 0 : i32
    %c0_i32_1 = arith.constant 0 : i32
    return %c0_i32, %c0_i32_0 : i32, i32
  }
  func.func @transform_9(%arg0: i32) -> (i32, i32) {
    %c0_i32 = arith.constant 0 : i32
    %c0_i32_0 = arith.constant 0 : i32
    return %arg0, %c0_i32 : i32, i32
  }
}

</mosaic_0001>

<llo_original>
// kernel: gaussian_network_forward.1
$region0: #{gaussian_network_forward.1}
  #allocation0 [shape = 'u32[]', space=smem, size = 0x4, offset = 0x4, fixed_abs, tag = 'smem constant byte address 0x4 - core index']
  #allocation1 [shape = 'u32[72,128]{1,0:T(1,128)}', space=vmem, size = 0x9000, scoped, tag = 'internal scratch']
  %s0 = inlined_call_operand.hbm [shape: f32[8,16], index: 0, kind: input, shape index: {}]
  %s1 = inlined_call_operand.hbm [shape: f32[8,16], index: 1, kind: input, shape index: {}]
  %s2 = inlined_call_operand.hbm [shape: bf16[16,128], index: 2, kind: input, shape index: {}]
  %s3 = inlined_call_operand.hbm [shape: bf16[16,128], index: 3, kind: input, shape index: {}]
  %s4 = inlined_call_operand.hbm [shape: f32[1,128], index: 4, kind: input, shape index: {}]
  %s5 = inlined_call_operand.hbm [shape: bf16[128,128], index: 5, kind: input, shape index: {}]
  %s6 = inlined_call_operand.vmem [shape: f32[1,128], index: 6, kind: input, shape index: {}]
  %s7 = inlined_call_operand.hbm [shape: bf16[128,128], index: 7, kind: input, shape index: {}]
  %s8 = inlined_call_operand.hbm [shape: f32[1,128], index: 8, kind: input, shape index: {}]
  %s9 = inlined_call_operand.vmem [shape: f32[8,128], index: 9, kind: output, shape index: {}]
  %s10 = sld [smem:[#allocation0]]
  $region78: #{gaussian_network_forward.1} parent=0
    _
  %s12 = ssub.s32 1, %s10
  %s13 = scalar_select 0, %s12, %s10
  $region1: #{gaussian_network_forward.1} parent=0
    #allocation2 [shape = 'u8[4096]{0}', space=vmem, size = 0x1000, scoped, tag = 'input window, operand 0, single buffered']
    #allocation3 [shape = 's32[1]{0}', space=sflag, size = 0x4, scoped, tag = 'scoped memory for gaussian_network_forward.1']
    #allocation4 [shape = 'u8[4096]{0}', space=vmem, size = 0x1000, scoped, tag = 'input window, operand 1, single buffered']
    #allocation5 [shape = 's32[1]{0}', space=sflag, size = 0x4, scoped, tag = 'scoped memory for gaussian_network_forward.1']
    #allocation6 [shape = 'u8[4096]{0}', space=vmem, size = 0x1000, scoped, tag = 'input window, operand 2, single buffered']
    #allocation7 [shape = 'u8[4096]{0}', space=vmem, size = 0x1000, scoped, tag = 'input window, operand 3, single buffered']
    #allocation8 [shape = 's32[1]{0}', space=sflag, size = 0x4, scoped, tag = 'scoped memory for gaussian_network_forward.1']
    #allocation9 [shape = 'u8[512]{0}', space=vmem, size = 0x400, scoped, tag = 'input window, operand 4, single buffered']
    #allocation10 [shape = 'u8[32768]{0}', space=vmem, size = 0x8000, scoped, tag = 'input window, operand 5, single buffered']
    #allocation11 [shape = 's32[1]{0}', space=sflag, size = 0x4, scoped, tag = 'scoped memory for gaussian_network_forward.1']
    #allocation12 [shape = 'u8[32768]{0}', space=vmem, size = 0x8000, scoped, tag = 'input window, operand 7, single buffered']
    #allocation13 [shape = 'u8[512]{0}', space=vmem, size = 0x400, scoped, tag = 'input window, operand 8, single buffered']
    #allocation14 [shape = 's32[1]{0}', space=sflag, size = 0x4, scoped, tag = 'scoped memory for gaussian_network_forward.1']
    %14 = vsyncpa [#allocation3], 0
    %15 = vsyncpa [#allocation5], 0
    %16 = vsyncpa [#allocation8], 0
    %17 = vsyncpa [#allocation11], 0
    %18 = vsyncpa [#allocation14], 0
    // Predicated region
    $region2: #{gaussian_network_forward.1} parent=1 // pred_check
      _
    $region3: #{gaussian_network_forward.1} parent=1 // pred_check_branch
      %20 = sbr.rel (0) target = $region5
    $region4: #{gaussian_network_forward.1} parent=1 // pred_region
      %22 = vsyncadd [#allocation3], 0
      %s24 = sshll.u32 %s0, 4
      %s25 = int_to_ptr.hbm [resolvable:$true] %s24
      %s26 = sshll.u32 [#allocation2], 4
      %s27 = int_to_ptr.vmem [resolvable:$true] %s26
      %29 = dma.hbm_to_vmem [thread:$0]  %s25, 128, %s27, [#allocation3]
    $region5: #{gaussian_network_forward.1} parent=1 // pred_fallthru
      _
    // Predicated region
    $region6: #{gaussian_network_forward.1} parent=1 // pred_check
      _
    $region7: #{gaussian_network_forward.1} parent=1 // pred_check_branch
      %31 = sbr.rel (0) target = $region9
    $region8: #{gaussian_network_forward.1} parent=1 // pred_region
      %33 = vsyncadd [#allocation5], 0
      %s35 = sshll.u32 %s1, 4
      %s36 = int_to_ptr.hbm [resolvable:$true] %s35
      %s37 = sshll.u32 [#allocation4], 4
      %s38 = int_to_ptr.vmem [resolvable:$true] %s37
      %40 = dma.hbm_to_vmem [thread:$0]  %s36, 128, %s38, [#allocation5]
    $region9: #{gaussian_network_forward.1} parent=1 // pred_fallthru
      _
    // Predicated region
    $region10: #{gaussian_network_forward.1} parent=1 // pred_check
      _
    $region11: #{gaussian_network_forward.1} parent=1 // pred_check_branch
      %42 = sbr.rel (0) target = $region13
    $region12: #{gaussian_network_forward.1} parent=1 // pred_region
      %44 = vsyncadd [#allocation5], 0
      %s45 = sshll.u32 %s2, 4
      %s46 = int_to_ptr.hbm [resolvable:$true] %s45
      %s47 = sshll.u32 [#allocation6], 4
      %s48 = int_to_ptr.vmem [resolvable:$true] %s47
      %53 = dma.hbm_to_vmem [thread:$0]  %s46, 128, %s48, [#allocation5], 64, 64, 4
    $region13: #{gaussian_network_forward.1} parent=1 // pred_fallthru
      _
    // Predicated region
    $region14: #{gaussian_network_forward.1} parent=1 // pred_check
      _
    $region15: #{gaussian_network_forward.1} parent=1 // pred_check_branch
      %55 = sbr.rel (0) target = $region17
    $region16: #{gaussian_network_forward.1} parent=1 // pred_region
      %57 = vsyncadd [#allocation8], 0
      %s58 = sshll.u32 %s3, 4
      %s59 = int_to_ptr.hbm [resolvable:$true] %s58
      %s60 = sshll.u32 [#allocation7], 4
      %s61 = int_to_ptr.vmem [resolvable:$true] %s60
      %66 = dma.hbm_to_vmem [thread:$0]  %s59, 128, %s61, [#allocation8], 64, 64, 4
    $region17: #{gaussian_network_forward.1} parent=1 // pred_fallthru
      _
    // Predicated region
    $region18: #{gaussian_network_forward.1} parent=1 // pred_check
      _
    $region19: #{gaussian_network_forward.1} parent=1 // pred_check_branch
      %68 = sbr.rel (0) target = $region21
    $region20: #{gaussian_network_forward.1} parent=1 // pred_region
      %70 = vsyncadd [#allocation8], 0
      %s72 = sshll.u32 %s4, 4
      %s73 = int_to_ptr.hbm [resolvable:$true] %s72
      %s74 = sshll.u32 [#allocation9], 4
      %s75 = int_to_ptr.vmem [resolvable:$true] %s74
      %77 = dma.hbm_to_vmem [thread:$0]  %s73, 16, %s75, [#allocation8]
    $region21: #{gaussian_network_forward.1} parent=1 // pred_fallthru
      _
    // Predicated region
    $region22: #{gaussian_network_forward.1} parent=1 // pred_check
      _
    $region23: #{gaussian_network_forward.1} parent=1 // pred_check_branch
      %79 = sbr.rel (0) target = $region25
    $region24: #{gaussian_network_forward.1} parent=1 // pred_region
      %81 = vsyncadd [#allocation11], 0
      %s82 = sshll.u32 %s5, 4
      %s83 = int_to_ptr.hbm [resolvable:$true] %s82
      %s84 = sshll.u32 [#allocation10], 4
      %s85 = int_to_ptr.vmem [resolvable:$true] %s84
      %90 = dma.hbm_to_vmem [thread:$0]  %s83, 1024, %s85, [#allocation11], 64, 64, 4
    $region25: #{gaussian_network_forward.1} parent=1 // pred_fallthru
      _
    // Predicated region
    $region26: #{gaussian_network_forward.1} parent=1 // pred_check
      _
    $region27: #{gaussian_network_forward.1} parent=1 // pred_check_branch
      %92 = sbr.rel (0) target = $region29
    $region28: #{gaussian_network_forward.1} parent=1 // pred_region
      _
    $region29: #{gaussian_network_forward.1} parent=1 // pred_fallthru
      _
    // Predicated region
    $region30: #{gaussian_network_forward.1} parent=1 // pred_check
      _
    $region31: #{gaussian_network_forward.1} parent=1 // pred_check_branch
      %94 = sbr.rel (0) target = $region33
    $region32: #{gaussian_network_forward.1} parent=1 // pred_region
      %96 = vsyncadd [#allocation11], 0
      %s97 = sshll.u32 %s7, 4
      %s98 = int_to_ptr.hbm [resolvable:$true] %s97
      %s99 = sshll.u32 [#allocation12], 4
      %s100 = int_to_ptr.vmem [resolvable:$true] %s99
      %105 = dma.hbm_to_vmem [thread:$0]  %s98, 1024, %s100, [#allocation11], 64, 64, 4
    $region33: #{gaussian_network_forward.1} parent=1 // pred_fallthru
      _
    // Predicated region
    $region34: #{gaussian_network_forward.1} parent=1 // pred_check
      _
    $region35: #{gaussian_network_forward.1} parent=1 // pred_check_branch
      %107 = sbr.rel (0) target = $region37
    $region36: #{gaussian_network_forward.1} parent=1 // pred_region
      %109 = vsyncadd [#allocation14], 0
      %s111 = sshll.u32 %s8, 4
      %s112 = int_to_ptr.hbm [resolvable:$true] %s111
      %s113 = sshll.u32 [#allocation13], 4
      %s114 = int_to_ptr.vmem [resolvable:$true] %s113
      %116 = dma.hbm_to_vmem [thread:$0]  %s112, 16, %s114, [#allocation14]
    $region37: #{gaussian_network_forward.1} parent=1 // pred_fallthru
      _
    // Predicated region
    $region38: #{gaussian_network_forward.1} parent=1 // pred_check
      _
    $region39: #{gaussian_network_forward.1} parent=1 // pred_check_branch
      %118 = sbr.rel (0) target = $region41
    $region40: #{gaussian_network_forward.1} parent=1 // pred_region
      %120 = dma.done [#allocation3], 128
    $region41: #{gaussian_network_forward.1} parent=1 // pred_fallthru
      _
    // Predicated region
    $region42: #{gaussian_network_forward.1} parent=1 // pred_check
      _
    $region43: #{gaussian_network_forward.1} parent=1 // pred_check_branch
      %122 = sbr.rel (0) target = $region45
    $region44: #{gaussian_network_forward.1} parent=1 // pred_region
      %124 = dma.done [#allocation5], 128
    $region45: #{gaussian_network_forward.1} parent=1 // pred_fallthru
      _
    // Predicated region
    $region46: #{gaussian_network_forward.1} parent=1 // pred_check
      _
    $region47: #{gaussian_network_forward.1} parent=1 // pred_check_branch
      %126 = sbr.rel (0) target = $region49
    $region48: #{gaussian_network_forward.1} parent=1 // pred_region
      %128 = dma.done [#allocation5], 128
    $region49: #{gaussian_network_forward.1} parent=1 // pred_fallthru
      _
    // Predicated region
    $region50: #{gaussian_network_forward.1} parent=1 // pred_check
      _
    $region51: #{gaussian_network_forward.1} parent=1 // pred_check_branch
      %130 = sbr.rel (0) target = $region53
    $region52: #{gaussian_network_forward.1} parent=1 // pred_region
      %132 = dma.done [#allocation8], 128
    $region53: #{gaussian_network_forward.1} parent=1 // pred_fallthru
      _
    // Predicated region
    $region54: #{gaussian_network_forward.1} parent=1 // pred_check
      _
    $region55: #{gaussian_network_forward.1} parent=1 // pred_check_branch
      %134 = sbr.rel (0) target = $region57
    $region56: #{gaussian_network_forward.1} parent=1 // pred_region
      %136 = dma.done [#allocation8], 16
    $region57: #{gaussian_network_forward.1} parent=1 // pred_fallthru
      _
    // Predicated region
    $region58: #{gaussian_network_forward.1} parent=1 // pred_check
      _
    $region59: #{gaussian_network_forward.1} parent=1 // pred_check_branch
      %138 = sbr.rel (0) target = $region61
    $region60: #{gaussian_network_forward.1} parent=1 // pred_region
      %140 = dma.done [#allocation11], 1024
    $region61: #{gaussian_network_forward.1} parent=1 // pred_fallthru
      _
    // Predicated region
    $region62: #{gaussian_network_forward.1} parent=1 // pred_check
      _
    $region63: #{gaussian_network_forward.1} parent=1 // pred_check_branch
      %142 = sbr.rel (0) target = $region65
    $region64: #{gaussian_network_forward.1} parent=1 // pred_region
      %144 = dma.done [#allocation11], 1024
    $region65: #{gaussian_network_forward.1} parent=1 // pred_fallthru
      _
    // Predicated region
    $region66: #{gaussian_network_forward.1} parent=1 // pred_check
      _
    $region67: #{gaussian_network_forward.1} parent=1 // pred_check_branch
      %146 = sbr.rel (0) target = $region69
    $region68: #{gaussian_network_forward.1} parent=1 // pred_region
      %148 = dma.done [#allocation14], 16
    $region69: #{gaussian_network_forward.1} parent=1 // pred_fallthru
      _
    %v150 = vld [vmem:[#allocation2] sm:$0xff]
    %v151 = vpack.c.bf16 %v150, %v150
    %v152 = vld [vmem:[#allocation6] sm:$0xf]
    %v153 = vld [vmem:[#allocation6 + $0x4] sm:$0xf]
    %v154 = vld [vmem:[#allocation4] sm:$0xff]
    %v155 = vpack.c.bf16 %v154, %v154
    %v156 = vld [vmem:[#allocation7] sm:$0xf]
    %v157 = vld [vmem:[#allocation7 + $0x4] sm:$0xf]
    %v160 = vunpack.c.l.b16 %v156
    %v161 = vunpack.c.l.b16 %v157
    %v162 = vpack.c.b16 %v161, %v160
    %vm164 = vcmask 130048
    %v166 = vsel %vm164, %v155, 0
    %168 = vmatpush.bf16.msra.mxu0 0
    %169 = vmatpush.bf16.msra.mxu0 0
    %170 = vmatpush.bf16.msra.mxu0 0
    %171 = vmatpush.bf16.msra.mxu0 0
    %172 = vmatpush.bf16.msra.mxu0 0
    %173 = vmatpush.bf16.msra.mxu0 0
    %174 = vmatpush.bf16.msra.mxu0 0
    %175 = vmatpush.bf16.msra.mxu0 %v162
    %176 = vmatmul.bf16.gmra.mxu0 %v166
    %v177 = vpop.f32.mrf.mxu0
    %v178 = vadd.f32 0.0, %v177
    %v179 = vpop.f32.mrf.mxu0
    %180 = vdwg.mxu0
    %v183 = vunpack.c.l.b16 %v152
    %v184 = vunpack.c.l.b16 %v153
    %v185 = vpack.c.b16 %v184, %v183
    %v188 = vsel %vm164, %v151, 0
    %190 = vmatpush.bf16.msra.mxu0 0
    %191 = vmatpush.bf16.msra.mxu0 0
    %192 = vmatpush.bf16.msra.mxu0 0
    %193 = vmatpush.bf16.msra.mxu0 0
    %194 = vmatpush.bf16.msra.mxu0 0
    %195 = vmatpush.bf16.msra.mxu0 0
    %196 = vmatpush.bf16.msra.mxu0 0
    %197 = vmatpush.bf16.msra.mxu0 %v185
    %198 = vmatmul.bf16.gmra.mxu0 %v188
    %v199 = vpop.f32.mrf.mxu0
    %v200 = vadd.f32 %v178, %v199
    %v201 = vpop.f32.mrf.mxu0
    %202 = vdwg.mxu0
    %v203 = vld [vmem:[#allocation9] sm:$0x1]
    %v205 = vperm.slane %v203, 0
    %v207 = vadd.f32 %v200, %v205
    %v208 = vmax.f32 %v207, 0.0
    %v209 = vpack.c.bf16 %v208, %v208
    %v210 = vld [vmem:[#allocation10] sm:$0xf]
    %v211 = vld [vmem:[#allocation10 + $0x4] sm:$0xf]
    %v212 = vld [vmem:[#allocation10 + $0x8] sm:$0xf]
    %v213 = vld [vmem:[#allocation10 + $0xc] sm:$0xf]
    %v214 = vld [vmem:[#allocation10 + $0x10] sm:$0xf]
    %v215 = vld [vmem:[#allocation10 + $0x14] sm:$0xf]
    %v216 = vld [vmem:[#allocation10 + $0x18] sm:$0xf]
    %v217 = vld [vmem:[#allocation10 + $0x1c] sm:$0xf]
    %v218 = vld [vmem:[#allocation10 + $0x20] sm:$0xf]
    %v219 = vld [vmem:[#allocation10 + $0x24] sm:$0xf]
    %v220 = vld [vmem:[#allocation10 + $0x28] sm:$0xf]
    %v221 = vld [vmem:[#allocation10 + $0x2c] sm:$0xf]
    %v222 = vld [vmem:[#allocation10 + $0x30] sm:$0xf]
    %v223 = vld [vmem:[#allocation10 + $0x34] sm:$0xf]
    %v224 = vld [vmem:[#allocation10 + $0x38] sm:$0xf]
    %v225 = vld [vmem:[#allocation10 + $0x3c] sm:$0xf]
    %v226 = vld [vmem:[%s6] sm:$0x1]
    %v228 = vperm.slane %v226, 0
    %v246 = vunpack.c.l.b16 %v210
    %v247 = vunpack.c.l.b16 %v211
    %v248 = vunpack.c.l.b16 %v212
    %v249 = vunpack.c.l.b16 %v213
    %v250 = vunpack.c.l.b16 %v214
    %v251 = vunpack.c.l.b16 %v215
    %v252 = vunpack.c.l.b16 %v216
    %v253 = vunpack.c.l.b16 %v217
    %v254 = vunpack.c.l.b16 %v218
    %v255 = vunpack.c.l.b16 %v219
    %v256 = vunpack.c.l.b16 %v220
    %v257 = vunpack.c.l.b16 %v221
    %v258 = vunpack.c.l.b16 %v222
    %v259 = vunpack.c.l.b16 %v223
    %v260 = vunpack.c.l.b16 %v224
    %v261 = vunpack.c.l.b16 %v225
    %v262 = vpack.c.b16 %v247, %v246
    %v263 = vpack.c.b16 %v249, %v248
    %v264 = vpack.c.b16 %v251, %v250
    %v265 = vpack.c.b16 %v253, %v252
    %v266 = vpack.c.b16 %v255, %v254
    %v267 = vpack.c.b16 %v257, %v256
    %v268 = vpack.c.b16 %v259, %v258
    %v269 = vpack.c.b16 %v261, %v260
    %278 = vmatpush.bf16.msra.mxu0 %v269
    %279 = vmatpush.bf16.msra.mxu0 %v268
    %280 = vmatpush.bf16.msra.mxu0 %v267
    %281 = vmatpush.bf16.msra.mxu0 %v266
    %282 = vmatpush.bf16.msra.mxu0 %v265
    %283 = vmatpush.bf16.msra.mxu0 %v264
    %284 = vmatpush.bf16.msra.mxu0 %v263
    %285 = vmatpush.bf16.msra.mxu0 %v262
    %286 = vmatmul.bf16.gmra.mxu0 %v209
    %v287 = vpop.f32.mrf.mxu0
    %v288 = vadd.f32 %v228, %v287
    %v289 = vpop.f32.mrf.mxu0
    %290 = vdwg.mxu0
    %v291 = vmax.f32 %v288, 0.0
    %v292 = vpack.c.bf16 %v291, %v291
    %v293 = vld [vmem:[#allocation12] sm:$0xf]
    %v294 = vld [vmem:[#allocation12 + $0x4] sm:$0xf]
    %v295 = vld [vmem:[#allocation12 + $0x8] sm:$0xf]
    %v296 = vld [vmem:[#allocation12 + $0xc] sm:$0xf]
    %v297 = vld [vmem:[#allocation12 + $0x10] sm:$0xf]
    %v298 = vld [vmem:[#allocation12 + $0x14] sm:$0xf]
    %v299 = vld [vmem:[#allocation12 + $0x18] sm:$0xf]
    %v300 = vld [vmem:[#allocation12 + $0x1c] sm:$0xf]
    %v301 = vld [vmem:[#allocation12 + $0x20] sm:$0xf]
    %v302 = vld [vmem:[#allocation12 + $0x24] sm:$0xf]
    %v303 = vld [vmem:[#allocation12 + $0x28] sm:$0xf]
    %v304 = vld [vmem:[#allocation12 + $0x2c] sm:$0xf]
    %v305 = vld [vmem:[#allocation12 + $0x30] sm:$0xf]
    %v306 = vld [vmem:[#allocation12 + $0x34] sm:$0xf]
    %v307 = vld [vmem:[#allocation12 + $0x38] sm:$0xf]
    %v308 = vld [vmem:[#allocation12 + $0x3c] sm:$0xf]
    %v309 = vld [vmem:[#allocation13] sm:$0x1]
    %v311 = vperm.slane %v309, 0
    %v329 = vunpack.c.l.b16 %v293
    %v330 = vunpack.c.l.b16 %v294
    %v331 = vunpack.c.l.b16 %v295
    %v332 = vunpack.c.l.b16 %v296
    %v333 = vunpack.c.l.b16 %v297
    %v334 = vunpack.c.l.b16 %v298
    %v335 = vunpack.c.l.b16 %v299
    %v336 = vunpack.c.l.b16 %v300
    %v337 = vunpack.c.l.b16 %v301
    %v338 = vunpack.c.l.b16 %v302
    %v339 = vunpack.c.l.b16 %v303
    %v340 = vunpack.c.l.b16 %v304
    %v341 = vunpack.c.l.b16 %v305
    %v342 = vunpack.c.l.b16 %v306
    %v343 = vunpack.c.l.b16 %v307
    %v344 = vunpack.c.l.b16 %v308
    %v345 = vpack.c.b16 %v330, %v329
    %v346 = vpack.c.b16 %v332, %v331
    %v347 = vpack.c.b16 %v334, %v333
    %v348 = vpack.c.b16 %v336, %v335
    %v349 = vpack.c.b16 %v338, %v337
    %v350 = vpack.c.b16 %v340, %v339
    %v351 = vpack.c.b16 %v342, %v341
    %v352 = vpack.c.b16 %v344, %v343
    %361 = vmatpush.bf16.msra.mxu0 %v352
    %362 = vmatpush.bf16.msra.mxu0 %v351
    %363 = vmatpush.bf16.msra.mxu0 %v350
    %364 = vmatpush.bf16.msra.mxu0 %v349
    %365 = vmatpush.bf16.msra.mxu0 %v348
    %366 = vmatpush.bf16.msra.mxu0 %v347
    %367 = vmatpush.bf16.msra.mxu0 %v346
    %368 = vmatpush.bf16.msra.mxu0 %v345
    %369 = vmatmul.bf16.gmra.mxu0 %v292
    %v370 = vpop.f32.mrf.mxu0
    %v371 = vadd.f32 %v311, %v370
    %v372 = vpop.f32.mrf.mxu0
    %373 = vdwg.mxu0
    %374 = vst [vmem:[%s9] sm:$0xff] %v371
    // Predicated region
    $region70: #{gaussian_network_forward.1} parent=1 // pred_check
      _
    $region71: #{gaussian_network_forward.1} parent=1 // pred_check_branch
      %376 = sbr.rel (0) target = $region73
    $region72: #{gaussian_network_forward.1} parent=1 // pred_region
      _
    $region73: #{gaussian_network_forward.1} parent=1 // pred_fallthru
      _
    // Predicated region
    $region74: #{gaussian_network_forward.1} parent=1 // pred_check
      _
    $region75: #{gaussian_network_forward.1} parent=1 // pred_check_branch
      %378 = sbr.rel (0) target = $region77
    $region76: #{gaussian_network_forward.1} parent=1 // pred_region
      _
    $region77: #{gaussian_network_forward.1} parent=1 // pred_fallthru
      _
    %379 = vsyncpa [#allocation3], 1
    %380 = vsyncpa [#allocation5], 1
    %381 = vsyncpa [#allocation8], 1
    %382 = vsyncpa [#allocation11], 1
    %383 = vsyncpa [#allocation14], 1

</llo_original>
